<compile_context>
chip_gen: v7x
topology: tpu7x:2x2x1
jax: 0.10.0
libtpu: 0.0.40
codegen_flags: <defaults>
</compile_context>

<pallas_src>
import functools

import jax
import jax.numpy as jnp
from jax import lax
from jax.experimental import pallas as pl
from jax.experimental.pallas import tpu as pltpu


def _round_up(x, m):
    return ((x + m - 1) // m) * m


# ----------------------------------------------------------------------------
# Pallas kernel: per-image, per-class pixel counts and thresholded-prob^2 sums
# ----------------------------------------------------------------------------
def _accumulate(p, lane_valid, ignore_f, hist_ref, s_ref):
    """p: (C, tm) f32 tile (already zeroed on invalid lanes in the tail path)."""
    # per-pixel max over the class (sublane) axis
    maxp = jnp.max(p, axis=0, keepdims=True)                     # (1, tm)

    # valid = inside the un-padded image AND maxpred != ignore_index
    valid = maxp != ignore_f
    if lane_valid is not None:
        valid = jnp.logical_and(valid, lane_valid)
    validf = valid.astype(jnp.float32)                           # (1, tm)

    # one-hot of the argmax built without iotas; exact ties split fractionally
    is_max = (p == maxp).astype(jnp.float32)                     # (C, tm)
    cnt = jnp.sum(is_max, axis=0, keepdims=True)                 # (1, tm), >= 1
    onehot = is_max * (validf / cnt)                             # (C, tm)

    # thresholded squared probabilities, summed over classes per pixel
    psq = p * p
    psq = jnp.where(psq > 0.5, psq, 0.0)
    s_pix = jnp.sum(psq, axis=0, keepdims=True)                  # (1, tm)

    hist_ref[...] += jnp.sum(onehot, axis=1, keepdims=True)          # (C, 1)
    s_ref[...] += jnp.sum(onehot * s_pix, axis=1, keepdims=True)     # (C, 1)


def _iw_maxsquare_kernel(prob_ref, hist_ref, s_ref, *, n_valid, ignore_index,
                         tile_m, tiles_per_half, never_tail):
    h = pl.program_id(0)          # megacore pixel-range split
    j = pl.program_id(2)          # tile index within the half (reduction axis)
    blk = h * tiles_per_half + j  # logical pixel-block index

    @pl.when(j == 0)
    def _init():
        hist_ref[...] = jnp.zeros_like(hist_ref)
        s_ref[...] = jnp.zeros_like(s_ref)

    if never_tail:
        # Statically known: every block is fully inside the image.
        _accumulate(prob_ref[...], None, ignore_index, hist_ref, s_ref)
    else:
        is_tail = (blk + 1) * tile_m > n_valid

        @pl.when(jnp.logical_not(is_tail))
        def _full():
            _accumulate(prob_ref[...], None, ignore_index, hist_ref, s_ref)

        @pl.when(is_tail)
        def _tail():
            # Mask p itself before max/square: out-of-bounds block contents
            # (including duplicate clamped blocks) are unspecified.
            pix = blk * tile_m + lax.broadcasted_iota(jnp.int32, (1, tile_m), 1)
            lane_valid = pix < n_valid
            p = jnp.where(lane_valid, prob_ref[...], 0.0)
            _accumulate(p, lane_valid, ignore_index, hist_ref, s_ref)


def _per_class_stats(prob, *, ignore_index=-1, max_tile=32768):
    """Returns (hist, S), each (N, C):
       hist[n,c] = #valid pixels of image n whose argmax class is c
       S[n,c]    = sum over those pixels of sum_c' where(p^2>0.5, p^2, 0)."""
    N, C, H, W = prob.shape
    M = H * W
    pf = prob.reshape(N, C, M).astype(jnp.float32)

    # Lane tile: a multiple of 128 that never exceeds M (no array padding).
    if M < 128:
        tm = M                                    # block == full dim is allowed
    else:
        tm = max(128, min(_round_up(max_tile, 128), (M // 128) * 128))
    n_blocks = pl.cdiv(M, tm)

    # Leading 2-way pixel split so both v7x TensorCores stay busy when N is small.
    split = 2 if n_blocks >= 2 else 1
    tiles_per_half = pl.cdiv(n_blocks, split)
    exact_cover = (split * tiles_per_half == n_blocks)
    never_tail = exact_cover and (M % tm == 0)

    if exact_cover:
        def in_map(h, n, j):
            return (n, 0, h * tiles_per_half + j)
    else:
        # Clamp duplicate trailing blocks onto the last real block; the kernel
        # masks them out entirely (pix >= M), so they contribute nothing.
        def in_map(h, n, j):
            return (n, 0, jnp.minimum(h * tiles_per_half + j, n_blocks - 1))

    kern = functools.partial(
        _iw_maxsquare_kernel, n_valid=M, ignore_index=float(ignore_index),
        tile_m=tm, tiles_per_half=tiles_per_half, never_tail=never_tail)

    hist, ssum = pl.pallas_call(
        kern,
        out_shape=(jax.ShapeDtypeStruct((split, N, C, 1), jnp.float32),
                   jax.ShapeDtypeStruct((split, N, C, 1), jnp.float32)),
        grid=(split, N, tiles_per_half),
        in_specs=[pl.BlockSpec((None, C, tm), in_map)],
        out_specs=(pl.BlockSpec((None, None, C, 1), lambda h, n, j: (h, n, 0, 0)),
                   pl.BlockSpec((None, None, C, 1), lambda h, n, j: (h, n, 0, 0))),
        compiler_params=pltpu.CompilerParams(
            dimension_semantics=("parallel", "parallel", "arbitrary"),
            vmem_limit_bytes=64 * 1024 * 1024),
    )(pf)

    hist = jnp.sum(hist[..., 0], axis=0)   # sum the two pixel-range halves -> (N, C)
    ssum = jnp.sum(ssum[..., 0], axis=0)
    return hist, ssum


# ----------------------------------------------------------------------------
# Forward pass (mirrors IW_MaxSquareloss.forward)
# ----------------------------------------------------------------------------
def iw_max_square_loss(pred, prob, label=None, *,
                       ignore_index=-1, num_class=19, ratio=0.2,
                       max_tile=32768):
    # `pred` is never used by the reference forward; kept for signature parity.
    N, C, H, W = prob.shape

    hist_arg, ssum = _per_class_stats(prob, ignore_index=ignore_index,
                                      max_tile=max_tile)

    if label is None:
        hist = hist_arg               # histogram of argpred over classes 0..C-1
    else:
        # torch.histc(label, bins=num_class+1, min=-1, max=num_class-1)[1:]:
        # count labels in [0, num_class-1], ignore everything else.
        lbl = label.reshape(N, H * W).astype(jnp.int32)
        valid = ((lbl >= 0) & (lbl < num_class)).astype(jnp.float32)
        idx = jnp.clip(lbl, 0, num_class - 1)
        hist = jax.vmap(
            lambda i, v: jnp.zeros((num_class,), jnp.float32).at[i].add(v)
        )(idx, valid)

    hist_total = jnp.sum(hist, axis=1, keepdims=True)
    denom = jnp.power(hist, ratio) * jnp.power(hist_total, 1.0 - ratio)
    wtab = 1.0 / jnp.maximum(denom, 1.0)          # (N, C) image-wise weights

    # sum_{pixels} probsq * weight[argpred]  ==  sum_c wtab[:,c] * S[:,c]
    loss = -jnp.sum(wtab * ssum) / (N * num_class)
    return loss


# ----------------------------------------------------------------------------
# Pure-JAX reference (literal transcription of the PyTorch forward, label=None)
# ----------------------------------------------------------------------------
def _reference_loss(prob, *, ignore_index=-1, num_class=19, ratio=0.2):
    N, C, H, W = prob.shape
    maxpred = jnp.max(prob, axis=1)
    argpred = jnp.argmax(prob, axis=1)
    mask_arg = maxpred != ignore_index
    argpred = jnp.where(mask_arg, argpred, ignore_index)
    classes = jnp.arange(num_class)
    hist = jnp.sum(argpred[..., None] == classes, axis=(1, 2)).astype(jnp.float32)
    w = 1.0 / jnp.maximum(hist ** ratio *
                          jnp.sum(hist, 1, keepdims=True) ** (1.0 - ratio), 1.0)
    idx = jnp.where(argpred < 0, num_class - 1, argpred)  # torch's w[-1] indexing
    weights = jnp.take_along_axis(w, idx.reshape(N, -1), axis=1).reshape(N, H, W)
    probsq = prob ** 2
    probsq = jnp.where(probsq > 0.5, probsq, 0.0)
    masked = jnp.where(mask_arg[:, None], probsq * weights[:, None], 0.0)
    return -jnp.sum(masked) / (N * num_class)


if __name__ == "__main__":
    root = jax.random.PRNGKey(0)

    def run_case(key, N, C, H, W, max_tile):
        k1, k2 = jax.random.split(key)
        logits = jax.random.normal(k1, (N, C, H, W), jnp.float32)
        # peaky softmax so that some prob^2 exceed the 0.5 threshold
        prob = jax.nn.softmax(5.0 * logits, axis=1)
        pred = jax.random.normal(k2, (N, C, H, W), jnp.float32)  # unused by forward

        loss_fn = jax.jit(functools.partial(iw_max_square_loss, num_class=C,
                                            max_tile=max_tile))
        loss = jax.block_until_ready(loss_fn(pred, prob))
        ref = jax.block_until_ready(
            _reference_loss(prob, ignore_index=-1, num_class=C, ratio=0.2))

        if not bool(jnp.isfinite(loss)):
            raise AssertionError(f"non-finite loss: {float(loss)}")
        if not bool(jnp.allclose(loss, ref, rtol=1e-4, atol=1e-6)):
            raise AssertionError(
                f"mismatch ({N},{C},{H},{W}): pallas={float(loss)} ref={float(ref)}")

    keys = jax.random.split(root, 3)
    # 1) single full tile (fast static path, no tail masking)
    run_case(keys[0], 2, 19, 16, 16, 32768)
    # 2) ragged last tile + 2-way pixel split
    run_case(keys[1], 2, 19, 15, 17, 32768)
    # 3) small batch, odd block count: split + clamped duplicate block + ragged tail
    run_case(keys[2], 1, 19, 24, 48, 512)

    print("KERNEL_OK")
</pallas_src>

<mosaic_0001>
module attributes {stable_mosaic.version = 11 : i64} {
  func.func @_iw_maxsquare_kernel(%arg0: i32, %arg1: i32, %arg2: i32, %arg3: memref<1x19x256xf32, #tpu.memory_space<vmem>>, %arg4: memref<1x1x19x1xf32, #tpu.memory_space<vmem>>, %arg5: memref<1x1x19x1xf32, #tpu.memory_space<vmem>>) attributes {dimension_semantics = [#tpu.dimension_semantics<parallel>, #tpu.dimension_semantics<parallel>, #tpu.dimension_semantics<arbitrary>], iteration_bounds = array<i64: 1, 2, 1>, scalar_prefetch = 0 : i64, scratch_operands = 0 : i64, tpu.core_type = #tpu.core_type<tc>, window_params = [{transform_indices = @transform_0, window_bounds = array<i64: 1, 19, 256>}, {transform_indices = @transform_1, window_bounds = array<i64: 1, 1, 19, 1>}, {transform_indices = @transform_2, window_bounds = array<i64: 1, 1, 19, 1>}]} {
    %c0_i32 = arith.constant 0 : i32
    %0 = arith.cmpi eq, %arg2, %c0_i32 : i32
    %1 = arith.extui %0 : i1 to i32
    %c0_i32_0 = arith.constant 0 : i32
    %2 = arith.cmpi ne, %1, %c0_i32_0 : i32
    scf.if %2 {
      %cst_26 = arith.constant 0.000000e+00 : f32
      %45 = vector.broadcast %cst_26 : f32 to vector<19x1xf32>
      %c0_27 = arith.constant 0 : index
      %c0_28 = arith.constant 0 : index
      %c0_29 = arith.constant 0 : index
      %c0_30 = arith.constant 0 : index
      %46 = vector.load %arg4[%c0_27, %c0_28, %c0_29, %c0_30] : memref<1x1x19x1xf32, #tpu.memory_space<vmem>>, vector<1x1x19x1xf32>
      %47 = vector.shape_cast %46 : vector<1x1x19x1xf32> to vector<19x1xf32>
      %48 = vector.shape_cast %45 : vector<19x1xf32> to vector<1x1x19x1xf32>
      tpu.vector_store %arg4[%c0_27, %c0_28, %c0_29, %c0_30], %48 {strides = array<i32>} : memref<1x1x19x1xf32, #tpu.memory_space<vmem>>, vector<1x1x19x1xf32>,
      %cst_31 = arith.constant 0.000000e+00 : f32
      %49 = vector.broadcast %cst_31 : f32 to vector<19x1xf32>
      %c0_32 = arith.constant 0 : index
      %c0_33 = arith.constant 0 : index
      %c0_34 = arith.constant 0 : index
      %c0_35 = arith.constant 0 : index
      %50 = vector.load %arg5[%c0_32, %c0_33, %c0_34, %c0_35] : memref<1x1x19x1xf32, #tpu.memory_space<vmem>>, vector<1x1x19x1xf32>
      %51 = vector.shape_cast %50 : vector<1x1x19x1xf32> to vector<19x1xf32>
      %52 = vector.shape_cast %49 : vector<19x1xf32> to vector<1x1x19x1xf32>
      tpu.vector_store %arg5[%c0_32, %c0_33, %c0_34, %c0_35], %52 {strides = array<i32>} : memref<1x1x19x1xf32, #tpu.memory_space<vmem>>, vector<1x1x19x1xf32>,
    } else {
    }
    %c0 = arith.constant 0 : index
    %c0_1 = arith.constant 0 : index
    %c0_2 = arith.constant 0 : index
    %3 = vector.load %arg3[%c0, %c0_1, %c0_2] : memref<1x19x256xf32, #tpu.memory_space<vmem>>, vector<1x19x256xf32>
    %4 = vector.shape_cast %3 : vector<1x19x256xf32> to vector<19x256xf32>
    %cst = arith.constant dense<0xFF800000> : vector<256xf32>
    %5 = vector.multi_reduction <maximumf>, %4, %cst [0] : vector<19x256xf32> to vector<256xf32>
    %6 = vector.shape_cast %5 : vector<256xf32> to vector<1x256xf32>
    %cst_3 = arith.constant -1.000000e+00 : f32
    %7 = vector.broadcast %cst_3 : f32 to vector<1x256xf32>
    %8 = arith.cmpf one, %6, %7 : vector<1x256xf32>
    %9 = arith.extui %8 : vector<1x256xi1> to vector<1x256xi32>
    %10 = arith.sitofp %9 : vector<1x256xi32> to vector<1x256xf32>
    %11 = vector.broadcast %6 : vector<1x256xf32> to vector<19x256xf32>
    %12 = arith.cmpf oeq, %4, %11 : vector<19x256xf32>
    %13 = arith.extui %12 : vector<19x256xi1> to vector<19x256xi32>
    %14 = arith.sitofp %13 : vector<19x256xi32> to vector<19x256xf32>
    %cst_4 = arith.constant dense<0.000000e+00> : vector<256xf32>
    %15 = vector.multi_reduction <add>, %14, %cst_4 [0] : vector<19x256xf32> to vector<256xf32>
    %16 = vector.shape_cast %15 : vector<256xf32> to vector<1x256xf32>
    %17 = arith.divf %10, %16 : vector<1x256xf32>
    %18 = vector.broadcast %17 : vector<1x256xf32> to vector<19x256xf32>
    %19 = arith.mulf %14, %18 : vector<19x256xf32>
    %20 = arith.mulf %4, %4 : vector<19x256xf32>
    %cst_5 = arith.constant 5.000000e-01 : f32
    %21 = vector.broadcast %cst_5 : f32 to vector<19x256xf32>
    %22 = arith.cmpf ogt, %20, %21 : vector<19x256xf32>
    %cst_6 = arith.constant 0.000000e+00 : f32
    %23 = vector.broadcast %cst_6 : f32 to vector<19x256xf32>
    %24 = arith.select %22, %20, %23 : vector<19x256xi1>, vector<19x256xf32>
    %cst_7 = arith.constant dense<0.000000e+00> : vector<256xf32>
    %25 = vector.multi_reduction <add>, %24, %cst_7 [0] : vector<19x256xf32> to vector<256xf32>
    %26 = vector.shape_cast %25 : vector<256xf32> to vector<1x256xf32>
    %c0_8 = arith.constant 0 : index
    %c0_9 = arith.constant 0 : index
    %c0_10 = arith.constant 0 : index
    %c0_11 = arith.constant 0 : index
    %27 = vector.load %arg4[%c0_8, %c0_9, %c0_10, %c0_11] : memref<1x1x19x1xf32, #tpu.memory_space<vmem>>, vector<1x1x19x1xf32>
    %28 = vector.shape_cast %27 : vector<1x1x19x1xf32> to vector<19x1xf32>
    %cst_12 = arith.constant dense<0.000000e+00> : vector<19xf32>
    %29 = vector.multi_reduction <add>, %19, %cst_12 [1] : vector<19x256xf32> to vector<19xf32>
    %30 = vector.shape_cast %29 : vector<19xf32> to vector<19x1xf32>
    %31 = arith.addf %28, %30 : vector<19x1xf32>
    %c0_13 = arith.constant 0 : index
    %c0_14 = arith.constant 0 : index
    %c0_15 = arith.constant 0 : index
    %c0_16 = arith.constant 0 : index
    %32 = vector.load %arg4[%c0_13, %c0_14, %c0_15, %c0_16] : memref<1x1x19x1xf32, #tpu.memory_space<vmem>>, vector<1x1x19x1xf32>
    %33 = vector.shape_cast %32 : vector<1x1x19x1xf32> to vector<19x1xf32>
    %34 = vector.shape_cast %31 : vector<19x1xf32> to vector<1x1x19x1xf32>
    tpu.vector_store %arg4[%c0_13, %c0_14, %c0_15, %c0_16], %34 {strides = array<i32>} : memref<1x1x19x1xf32, #tpu.memory_space<vmem>>, vector<1x1x19x1xf32>,
    %c0_17 = arith.constant 0 : index
    %c0_18 = arith.constant 0 : index
    %c0_19 = arith.constant 0 : index
    %c0_20 = arith.constant 0 : index
    %35 = vector.load %arg5[%c0_17, %c0_18, %c0_19, %c0_20] : memref<1x1x19x1xf32, #tpu.memory_space<vmem>>, vector<1x1x19x1xf32>
    %36 = vector.shape_cast %35 : vector<1x1x19x1xf32> to vector<19x1xf32>
    %37 = vector.broadcast %26 : vector<1x256xf32> to vector<19x256xf32>
    %38 = arith.mulf %19, %37 : vector<19x256xf32>
    %cst_21 = arith.constant dense<0.000000e+00> : vector<19xf32>
    %39 = vector.multi_reduction <add>, %38, %cst_21 [1] : vector<19x256xf32> to vector<19xf32>
    %40 = vector.shape_cast %39 : vector<19xf32> to vector<19x1xf32>
    %41 = arith.addf %36, %40 : vector<19x1xf32>
    %c0_22 = arith.constant 0 : index
    %c0_23 = arith.constant 0 : index
    %c0_24 = arith.constant 0 : index
    %c0_25 = arith.constant 0 : index
    %42 = vector.load %arg5[%c0_22, %c0_23, %c0_24, %c0_25] : memref<1x1x19x1xf32, #tpu.memory_space<vmem>>, vector<1x1x19x1xf32>
    %43 = vector.shape_cast %42 : vector<1x1x19x1xf32> to vector<19x1xf32>
    %44 = vector.shape_cast %41 : vector<19x1xf32> to vector<1x1x19x1xf32>
    tpu.vector_store %arg5[%c0_22, %c0_23, %c0_24, %c0_25], %44 {strides = array<i32>} : memref<1x1x19x1xf32, #tpu.memory_space<vmem>>, vector<1x1x19x1xf32>,
    return
  }
  func.func @transform_0(%arg0: i32, %arg1: i32, %arg2: i32) -> (i32, i32, i32) {
    %c1_i32 = arith.constant 1 : i32
    %0 = arith.muli %arg0, %c1_i32 : i32
    %1 = arith.addi %0, %arg2 : i32
    %c0_i32 = arith.constant 0 : i32
    %c0_i32_0 = arith.constant 0 : i32
    return %arg1, %c0_i32, %1 : i32, i32, i32
  }
  func.func @transform_1(%arg0: i32, %arg1: i32, %arg2: i32) -> (i32, i32, i32, i32) {
    %c0_i32 = arith.constant 0 : i32
    %c0_i32_0 = arith.constant 0 : i32
    %c0_i32_1 = arith.constant 0 : i32
    return %arg0, %arg1, %c0_i32, %c0_i32_0 : i32, i32, i32, i32
  }
  func.func @transform_2(%arg0: i32, %arg1: i32, %arg2: i32) -> (i32, i32, i32, i32) {
    %c0_i32 = arith.constant 0 : i32
    %c0_i32_0 = arith.constant 0 : i32
    %c0_i32_1 = arith.constant 0 : i32
    return %arg0, %arg1, %c0_i32, %c0_i32_0 : i32, i32, i32, i32
  }
}

</mosaic_0001>

<llo_original>
// kernel: iw_max_square_loss.1
$region0: #{iw_max_square_loss.1}
  #allocation0 [shape = 'u32[]', space=smem, size = 0x4, offset = 0x4, fixed_abs, tag = 'smem constant byte address 0x4 - core index']
  #allocation1 [shape = 'u32[144,128]{1,0:T(1,128)}', space=vmem, size = 0x12000, scoped, tag = 'internal scratch']
  %s0 = inlined_call_operand.hbm [shape: f32[2,19,256], index: 0, kind: input, shape index: {}]
  %s1 = inlined_call_operand.hbm [shape: f32[1,2,19,1], index: 1, kind: output, shape index: {0}]
  %s2 = inlined_call_operand.hbm [shape: f32[1,2,19,1], index: 2, kind: output, shape index: {1}]
  %3 = xla_tuple %s1, %s2
  %s4 = sld [smem:[#allocation0]]
  $region53: #{iw_max_square_loss.1} parent=0
    _
  %s6 = ssub.s32 1, %s4
  %s7 = scalar_select 0, %s6, %s4
  $region1: #{iw_max_square_loss.1} parent=0
    #allocation2 [shape = 'u8[49152]{0}', space=vmem, size = 0xc000, scoped, tag = 'input window, operand 0']
    #allocation3 [shape = 's32[2]{0}', space=sflag, size = 0x8, scoped, tag = 'scoped memory for iw_max_square_loss.1']
    #allocation4 [shape = 's32[2]{0}', space=sflag, size = 0x8, scoped, tag = 'scoped memory for iw_max_square_loss.1']
    #allocation5 [shape = 'u8[24576]{0}', space=vmem, size = 0x6000, scoped, tag = 'output window, operand 0']
    #allocation6 [shape = 'u8[24576]{0}', space=vmem, size = 0x6000, scoped, tag = 'output window, operand 1']
    #allocation7 [shape = 's32[2]{0}', space=sflag, size = 0x8, scoped, tag = 'scoped memory for iw_max_square_loss.1']
    %8 = vsyncpa [#allocation3], 0
    %s9 = scalar_lea.sflag [#allocation3], 1
    %10 = vsyncpa %s9, 0
    %11 = vsyncpa [#allocation4], 0
    %s12 = scalar_lea.sflag [#allocation4], 1
    %13 = vsyncpa %s12, 0
    %14 = vsyncpa [#allocation7], 0
    %s15 = scalar_lea.sflag [#allocation7], 1
    %16 = vsyncpa %s15, 0
    loop: start=0, step=1, limit=4
    $region2: #{iw_max_square_loss.1} parent=1 // loop_pre_header
      _
    $region3: #{iw_max_square_loss.1} parent=1 // loop_header
      %s18 = sphi 0, %s22
      %p19 = scmp.ge.s32.totalorder %s18, 4
      %s25 = sphi 0, %s44
      %s26 = sphi 0, %s40
      %s27 = sphi 0, %s36
      %s28 = sphi 0, %s25
      %s29 = sphi 0, %s26
      %s30 = sphi 0, %s27
      %s31 = sphi 0, %s28
      %s32 = sphi 0, %s29
      %s33 = sphi 0, %s30
      %s51 = sphi 0, %s53
      %s54 = sphi 0, %s51
      %s55 = sphi 0, %s54
      %s71 = sphi 0, %s55
      %s79 = sphi 0, %s81
      %s82 = sphi 0, %s79
      %s83 = sphi 0, %s82
      %s99 = sphi 0, %s83
      %s107 = sphi 0, %s109
      %s110 = sphi 0, %s107
      %s111 = sphi 0, %s110
      %s127 = sphi 0, %s111
    $region4: #{iw_max_square_loss.1} parent=1 // loop_header_branch
      %21 = sbr.rel (%p19) target = $region8
    $region5: #{iw_max_square_loss.1} parent=1 // loop_body
      %s23 = ssub.s32 %s18, 1
      %s24 = ssub.s32 %s18, 2
      %s34 = sadd.s32 1, %s27
      %p35 = scmp.ge.s32.totalorder %s34, 1
      %s36 = scalar_select %p35, 0, %s34
      %s37 = sadd.s32 1, %s26
      %s38 = scalar_select %p35, %s37, %s26
      %p39 = scmp.ge.s32.totalorder %s38, 2
      %s40 = scalar_select %p39, 0, %s38
      %s41 = sadd.s32 1, %s25
      %s42 = scalar_select %p39, %s41, %s25
      %p43 = scmp.ge.s32.totalorder %s42, 1
      %s44 = scalar_select %p43, 0, %s42
      %s45 = sadd.s32 %s25, %s27
      %s46 = sadd.s32 %s44, %s36
      %s47 = ssub.s32 %s26, %s40
      %s48 = ssub.s32 %s45, %s46
      %s49 = sor.u32 %s47, %s48
      %p50 = scmp.eq.s32.totalorder %s49, 0
      %s52 = sadd.s32 %s51, 1
      %s53 = scalar_select %p50, %s51, %s52
      %p56 = pneg %p50
      %p57 = scmp.eq.s32.totalorder %s18, 1
      %p58 = por %p56, %p57
      %p59 = scmp.ne.s32.totalorder %s51, %s54
      %p60 = scmp.eq.s32.totalorder %s18, 0
      %p61 = por %p59, %p60
      %p62 = scmp.ne.s32.totalorder %s51, %s54
      %p63 = scmp.eq.s32.totalorder %s23, 1
      %p64 = por %p62, %p63
      %p65 = scmp.ne.s32.totalorder %s54, %s55
      %p66 = scmp.eq.s32.totalorder %s23, 0
      %p67 = por %p65, %p66
      %p68 = scmp.ne.s32.totalorder %s54, %s55
      %p69 = scmp.eq.s32.totalorder %s24, 1
      %p70 = por %p68, %p69
      %p72 = scmp.ne.s32.totalorder %s55, %s71
      %p73 = scmp.eq.s32.totalorder %s24, 0
      %p74 = por %p72, %p73
      %s75 = ssub.s32 %s25, %s44
      %s76 = ssub.s32 %s26, %s40
      %s77 = sor.u32 %s75, %s76
      %p78 = scmp.eq.s32.totalorder %s77, 0
      %s80 = sadd.s32 %s79, 1
      %s81 = scalar_select %p78, %s79, %s80
      %p84 = pneg %p78
      %p85 = scmp.eq.s32.totalorder %s18, 1
      %p86 = por %p84, %p85
      %p87 = scmp.ne.s32.totalorder %s79, %s82
      %p88 = scmp.eq.s32.totalorder %s18, 0
      %p89 = por %p87, %p88
      %p90 = scmp.ne.s32.totalorder %s79, %s82
      %p91 = scmp.eq.s32.totalorder %s23, 1
      %p92 = por %p90, %p91
      %p93 = scmp.ne.s32.totalorder %s82, %s83
      %p94 = scmp.eq.s32.totalorder %s23, 0
      %p95 = por %p93, %p94
      %p96 = scmp.ne.s32.totalorder %s82, %s83
      %p97 = scmp.eq.s32.totalorder %s24, 1
      %p98 = por %p96, %p97
      %p100 = scmp.ne.s32.totalorder %s83, %s99
      %p101 = scmp.eq.s32.totalorder %s24, 0
      %p102 = por %p100, %p101
      %s103 = ssub.s32 %s25, %s44
      %s104 = ssub.s32 %s26, %s40
      %s105 = sor.u32 %s103, %s104
      %p106 = scmp.eq.s32.totalorder %s105, 0
      %s108 = sadd.s32 %s107, 1
      %s109 = scalar_select %p106, %s107, %s108
      %p112 = pneg %p106
      %p113 = scmp.eq.s32.totalorder %s18, 1
      %p114 = por %p112, %p113
      %p115 = scmp.ne.s32.totalorder %s107, %s110
      %p116 = scmp.eq.s32.totalorder %s18, 0
      %p117 = por %p115, %p116
      %p118 = scmp.ne.s32.totalorder %s107, %s110
      %p119 = scmp.eq.s32.totalorder %s23, 1
      %p120 = por %p118, %p119
      %p121 = scmp.ne.s32.totalorder %s110, %s111
      %p122 = scmp.eq.s32.totalorder %s23, 0
      %p123 = por %p121, %p122
      %p124 = scmp.ne.s32.totalorder %s110, %s111
      %p125 = scmp.eq.s32.totalorder %s24, 1
      %p126 = por %p124, %p125
      %p128 = scmp.ne.s32.totalorder %s111, %s127
      %p129 = scmp.eq.s32.totalorder %s24, 0
      %p130 = por %p128, %p129
      %p131 = scmp.le.s32.totalorder 1, %s18
      %p132 = scmp.lt.s32.totalorder %s18, 3
      %p133 = pnand %p131, %p132
      %p134 = pneg %p133
      // Predicated region
      $region9: #{iw_max_square_loss.1} parent=5 // pred_check
        _
      $region10: #{iw_max_square_loss.1} parent=5 // pred_check_branch
        %136 = sbr.rel (%p133) target = $region12
      $region11: #{iw_max_square_loss.1} parent=5 // pred_region
        %s137 = ssub.s32 %s18, 1
      $region12: #{iw_max_square_loss.1} parent=5 // pred_fallthru
        _
      %p138 = scmp.lt.s32.totalorder %s18, 2
      // Predicated region
      $region13: #{iw_max_square_loss.1} parent=5 // pred_check
        %p139 = pneg %p138
      $region14: #{iw_max_square_loss.1} parent=5 // pred_check_branch
        %141 = sbr.rel (%p139) target = $region16
      $region15: #{iw_max_square_loss.1} parent=5 // pred_region
        // Predicated region
        $region17: #{iw_max_square_loss.1} parent=15 // pred_check
          %p142 = pneg %p61
        $region18: #{iw_max_square_loss.1} parent=15 // pred_check_branch
          %144 = sbr.rel (%p142) target = $region20
        $region19: #{iw_max_square_loss.1} parent=15 // pred_region
          %s145 = sand.u32 %s51, 1
          %s146 = scalar_lea.sflag [#allocation3], %s145
          %s147 = sand.u32 %s51, 1
          %s148 = smul.addr %s147, 48
          %s149 = scalar_lea.vmem [#allocation2], %s148
          %s150 = sadd.s32 %s25, %s27
          %s151 = smul.u32 2, %s150
          %s153 = ssub.s32 768, 768
          %154 = vsyncadd %s146, %s153
          %s155 = smul.addr %s26, 6
          %s156 = sadd.s32 %s151, %s155
          %s157 = smul.addr %s156, 128
          %s158 = scalar_lea.hbm %s0, %s157
          %s159 = sshll.u32 %s149, 4
          %s160 = int_to_ptr.vmem [resolvable:$true] %s159
          %165 = dma.hbm_to_vmem [thread:$0]  %s158, 768, %s160, %s146, 256, 256, 16
        $region20: #{iw_max_square_loss.1} parent=15 // pred_fallthru
          _
      $region16: #{iw_max_square_loss.1} parent=5 // pred_fallthru
        _
      %p166 = scmp.le.s32.totalorder 1, %s18
      %p167 = scmp.lt.s32.totalorder %s18, 3
      %p168 = pnand %p166, %p167
      %p169 = pneg %p168
      // Predicated region
      $region21: #{iw_max_square_loss.1} parent=5 // pred_check
        _
      $region22: #{iw_max_square_loss.1} parent=5 // pred_check_branch
        %171 = sbr.rel (%p168) target = $region24
      $region23: #{iw_max_square_loss.1} parent=5 // pred_region
        %s172 = ssub.s32 %s18, 1
        %s173 = sand.u32 %s54, 1
        %s174 = scalar_lea.sflag [#allocation3], %s173
        %s175 = sand.u32 %s54, 1
        %s176 = smul.addr %s175, 48
        %s177 = scalar_lea.vmem [#allocation2], %s176
        // Predicated region
        $region25: #{iw_max_square_loss.1} parent=23 // pred_check
          %p178 = pneg %p67
        $region26: #{iw_max_square_loss.1} parent=23 // pred_check_branch
          %180 = sbr.rel (%p178) target = $region28
        $region27: #{iw_max_square_loss.1} parent=23 // pred_region
          %181 = dma.done %s174, 768
        $region28: #{iw_max_square_loss.1} parent=23 // pred_fallthru
          _
        %s182 = sand.u32 %s54, 1
        %s183 = scalar_lea.sflag [#allocation3], %s182
        %s184 = sand.u32 %s54, 1
        %s185 = smul.addr %s184, 48
        %s186 = scalar_lea.vmem [#allocation2], %s185
        %p187 = pneg %p67
        %p188 = pneg %p64
        %p189 = pneg %p95
        %p190 = pneg %p92
        %s191 = sand.u32 %s82, 1
        %s192 = scalar_lea.sflag [#allocation4], %s191
        %s193 = sand.u32 %s82, 1
        %s194 = smul.addr %s193, 24
        %s195 = scalar_lea.vmem [#allocation5], %s194
        %p196 = pneg %p123
        %p197 = pneg %p120
        %s198 = sand.u32 %s110, 1
        %s199 = scalar_lea.sflag [#allocation7], %s198
        %s200 = sand.u32 %s110, 1
        %s201 = smul.addr %s200, 24
        %s202 = scalar_lea.vmem [#allocation6], %s201
        %s203 = sadd.s32 %s28, %s30
        %s204 = smul.u32 2, %s203
        %p205 = scmp.eq.s32.totalorder %s30, 0
        // Predicated region
        $region29: #{iw_max_square_loss.1} parent=23 // pred_check
          %p206 = pneg %p205
        $region30: #{iw_max_square_loss.1} parent=23 // pred_check_branch
          %208 = sbr.rel (%p206) target = $region32
        $region31: #{iw_max_square_loss.1} parent=23 // pred_region
          %vm209 = vcmask 7168
          %210 = vst.msk [vmem:[%s195] sm:$0xff] %vm209, 0.0
          %211 = vst.msk [vmem:[%s195 + $0x8] sm:$0xff] %vm209, 0.0
          %vm212 = vcmask 2048
          %213 = vst.msk [vmem:[%s195 + $0x10] sm:$0x7] %vm212, 0.0
          %214 = vst.msk [vmem:[%s202] sm:$0xff] %vm209, 0.0
          %215 = vst.msk [vmem:[%s202 + $0x8] sm:$0xff] %vm209, 0.0
          %216 = vst.msk [vmem:[%s202 + $0x10] sm:$0x7] %vm212, 0.0
        $region32: #{iw_max_square_loss.1} parent=23 // pred_fallthru
          _
        %v217 = vld [vmem:[%s177] sm:$0xff]
        %v218 = vld [vmem:[%s177 + $0x8] sm:$0xff]
        %v219 = vld [vmem:[%s177 + $0x10] sm:$0xff]
        %v220 = vld [vmem:[%s177 + $0x18] sm:$0xff]
        %v221 = vld [vmem:[%s177 + $0x20] sm:$0x7]
        %v222 = vld [vmem:[%s177 + $0x28] sm:$0x7]
        %vm223 = vcmask 1042432
        %v224 = vsel %vm223, %v221, -inf
        %v225 = vmax.f32 %v217, %v224
        %v226 = vmax.f32 %v225, %v219
        %v227 = vrot.slane %v226, 4
        %v228 = vmax.f32 %v226, %v227
        %v229 = vrot.slane %v228, 2
        %v230 = vmax.f32 %v228, %v229
        %v231 = vrot.slane %v230, 1
        %v232 = vmax.f32 %v230, %v231
        %v233 = vsel %vm223, %v222, -inf
        %v234 = vmax.f32 %v218, %v233
        %v235 = vmax.f32 %v234, %v220
        %v236 = vrot.slane %v235, 4
        %v237 = vmax.f32 %v235, %v236
        %v238 = vrot.slane %v237, 2
        %v239 = vmax.f32 %v237, %v238
        %v240 = vrot.slane %v239, 1
        %v241 = vmax.f32 %v239, %v240
        %vm242 = vcmp.ne.f32.partialorder %v232, -1.0
        %vm243 = vcmp.ne.f32.partialorder %v241, -1.0
        %v244 = vsel %vm242, 1, 0
        %v245 = vsel %vm243, 1, 0
        %v246 = vcvt.s32.f32 %v244
        %v247 = vcvt.s32.f32 %v245
        %vm248 = vcmp.eq.f32.partialorder %v217, %v232
        %vm249 = vcmp.eq.f32.partialorder %v218, %v241
        %vm250 = vcmp.eq.f32.partialorder %v219, %v232
        %vm251 = vcmp.eq.f32.partialorder %v220, %v241
        %vm252 = vcmp.eq.f32.partialorder %v221, %v232
        %vm253 = vcmp.eq.f32.partialorder %v222, %v241
        %v254 = vsel %vm248, 1, 0
        %v255 = vsel %vm249, 1, 0
        %v256 = vsel %vm250, 1, 0
        %v257 = vsel %vm251, 1, 0
        %v258 = vsel %vm252, 1, 0
        %v259 = vsel %vm253, 1, 0
        %v260 = vcvt.s32.f32 %v254
        %v261 = vcvt.s32.f32 %v255
        %v262 = vcvt.s32.f32 %v256
        %v263 = vcvt.s32.f32 %v257
        %v264 = vcvt.s32.f32 %v258
        %v265 = vcvt.s32.f32 %v259
        %v266 = vadd.f32 %v260, %v262
        %v267 = vsel %vm223, %v264, 0.0
        %v268 = vadd.f32 %v266, %v267
        %v269 = vrot.slane %v268, 4
        %v270 = vadd.f32 %v268, %v269
        %v271 = vrot.slane %v270, 2
        %v272 = vadd.f32 %v270, %v271
        %v273 = vrot.slane %v272, 1
        %v274 = vadd.f32 %v272, %v273
        %v275 = vadd.f32 %v261, %v263
        %v276 = vsel %vm223, %v265, 0.0
        %v277 = vadd.f32 %v275, %v276
        %v278 = vrot.slane %v277, 4
        %v279 = vadd.f32 %v277, %v278
        %v280 = vrot.slane %v279, 2
        %v281 = vadd.f32 %v279, %v280
        %v282 = vrot.slane %v281, 1
        %v283 = vadd.f32 %v281, %v282
        %v284 = vrcp.pop %v274
        %v285 = vmul.f32 %v246, %v284
        %v286 = vrcp.pop %v283
        %v287 = vmul.f32 %v247, %v286
        %v288 = vmul.f32 %v260, %v285
        %v289 = vmul.f32 %v261, %v287
        %v290 = vmul.f32 %v262, %v285
        %v291 = vmul.f32 %v263, %v287
        %v292 = vmul.f32 %v264, %v285
        %v293 = vmul.f32 %v265, %v287
        %v294 = vmul.f32 %v217, %v217
        %v295 = vmul.f32 %v218, %v218
        %v296 = vmul.f32 %v219, %v219
        %v297 = vmul.f32 %v220, %v220
        %v298 = vmul.f32 %v221, %v221
        %v299 = vmul.f32 %v222, %v222
        %vm300 = vcmp.gt.f32.partialorder %v294, 0.5
        %vm301 = vcmp.gt.f32.partialorder %v295, 0.5
        %vm302 = vcmp.gt.f32.partialorder %v296, 0.5
        %vm303 = vcmp.gt.f32.partialorder %v297, 0.5
        %vm304 = vcmp.gt.f32.partialorder %v298, 0.5
        %vm305 = vcmp.gt.f32.partialorder %v299, 0.5
        %v306 = vsel %vm300, %v294, 0.0
        %v307 = vsel %vm301, %v295, 0.0
        %v308 = vsel %vm302, %v296, 0.0
        %v309 = vsel %vm303, %v297, 0.0
        %v310 = vsel %vm304, %v298, 0.0
        %v311 = vsel %vm305, %v299, 0.0
        %v312 = vadd.f32 %v306, %v308
        %v313 = vsel %vm223, %v310, 0.0
        %v314 = vadd.f32 %v312, %v313
        %v315 = vrot.slane %v314, 4
        %v316 = vadd.f32 %v314, %v315
        %v317 = vrot.slane %v316, 2
        %v318 = vadd.f32 %v316, %v317
        %v319 = vrot.slane %v318, 1
        %v320 = vadd.f32 %v318, %v319
        %v321 = vadd.f32 %v307, %v309
        %v322 = vsel %vm223, %v311, 0.0
        %v323 = vadd.f32 %v321, %v322
        %v324 = vrot.slane %v323, 4
        %v325 = vadd.f32 %v323, %v324
        %v326 = vrot.slane %v325, 2
        %v327 = vadd.f32 %v325, %v326
        %v328 = vrot.slane %v327, 1
        %v329 = vadd.f32 %v327, %v328
        %v330 = vld [vmem:[%s195] sm:$0xff]
        %v331 = vld [vmem:[%s195 + $0x8] sm:$0xff]
        %v332 = vld [vmem:[%s195 + $0x10] sm:$0x7]
        %v333 = vadd.f32 %v288, %v289
        %334 = vadd.xlane.f32.xlu0 %v333
        %v335 = vpop.xlane.xlu0 %334
        %v336 = vadd.f32 %v290, %v291
        %337 = vadd.xlane.f32.xlu0 %v336
        %v338 = vpop.xlane.xlu0 %337
        %v339 = vsel %vm223, %v292, 0.0
        %v340 = vsel %vm223, %v293, 0.0
        %v341 = vadd.f32 %v339, %v340
        %342 = vadd.xlane.f32.xlu0 %v341
        %v343 = vpop.xlane.xlu0 %342
        %v344 = vadd.f32 %v330, %v335
        %v345 = vadd.f32 %v331, %v338
        %v346 = vadd.f32 %v332, %v343
        %vm347 = vcmask 7168
        %348 = vst.msk [vmem:[%s195] sm:$0xff] %vm347, %v344
        %349 = vst.msk [vmem:[%s195 + $0x8] sm:$0xff] %vm347, %v345
        %vm350 = vcmask 2048
        %351 = vst.msk [vmem:[%s195 + $0x10] sm:$0x7] %vm350, %v346
        %v352 = vld [vmem:[%s202] sm:$0xff]
        %v353 = vld [vmem:[%s202 + $0x8] sm:$0xff]
        %v354 = vld [vmem:[%s202 + $0x10] sm:$0x7]
        %v355 = vmul.f32 %v288, %v320
        %v356 = vmul.f32 %v289, %v329
        %v357 = vmul.f32 %v290, %v320
        %v358 = vmul.f32 %v291, %v329
        %v359 = vmul.f32 %v292, %v320
        %v360 = vmul.f32 %v293, %v329
        %v361 = vadd.f32 %v355, %v356
        %362 = vadd.xlane.f32.xlu0 %v361
        %v363 = vpop.xlane.xlu0 %362
        %v364 = vadd.f32 %v357, %v358
        %365 = vadd.xlane.f32.xlu0 %v364
        %v366 = vpop.xlane.xlu0 %365
        %v367 = vsel %vm223, %v359, 0.0
        %v368 = vsel %vm223, %v360, 0.0
        %v369 = vadd.f32 %v367, %v368
        %370 = vadd.xlane.f32.xlu0 %v369
        %v371 = vpop.xlane.xlu0 %370
        %v372 = vadd.f32 %v352, %v363
        %v373 = vadd.f32 %v353, %v366
        %v374 = vadd.f32 %v354, %v371
        %375 = vst.msk [vmem:[%s202] sm:$0xff] %vm347, %v372
        %376 = vst.msk [vmem:[%s202 + $0x8] sm:$0xff] %vm347, %v373
        %377 = vst.msk [vmem:[%s202 + $0x10] sm:$0x7] %vm350, %v374
        %s378 = sand.u32 %s82, 1
        %s379 = scalar_lea.sflag [#allocation4], %s378
        %s380 = sand.u32 %s82, 1
        %s381 = smul.addr %s380, 24
        %s382 = scalar_lea.vmem [#allocation5], %s381
        %s383 = sand.u32 %s110, 1
        %s384 = scalar_lea.sflag [#allocation7], %s383
        %s385 = sand.u32 %s110, 1
        %s386 = smul.addr %s385, 24
        %s387 = scalar_lea.vmem [#allocation6], %s386
        // Predicated region
        $region33: #{iw_max_square_loss.1} parent=23 // pred_check
          %p388 = pneg %p92
        $region34: #{iw_max_square_loss.1} parent=23 // pred_check_branch
          %390 = sbr.rel (%p388) target = $region36
        $region35: #{iw_max_square_loss.1} parent=23 // pred_region
          %s392 = ssub.s32 384, 384
          %393 = vsyncadd %s379, %s392
          %s394 = smul.addr %s29, 3
          %s395 = smul.addr %s28, 6
          %s396 = sadd.s32 %s394, %s395
          %s397 = smul.addr %s396, 128
          %s398 = scalar_lea.hbm %s1, %s397
          %s399 = sshll.u32 %s382, 4
          %s400 = int_to_ptr.vmem [resolvable:$true] %s399
          %405 = dma.vmem_to_hbm [thread:$0]  %s400, 384, %s398, %s379, 128, 128, 8
        $region36: #{iw_max_square_loss.1} parent=23 // pred_fallthru
          _
        // Predicated region
        $region37: #{iw_max_square_loss.1} parent=23 // pred_check
          %p406 = pneg %p120
        $region38: #{iw_max_square_loss.1} parent=23 // pred_check_branch
          %408 = sbr.rel (%p406) target = $region40
        $region39: #{iw_max_square_loss.1} parent=23 // pred_region
          %s410 = ssub.s32 384, 384
          %411 = vsyncadd %s384, %s410
          %s412 = smul.addr %s29, 3
          %s413 = smul.addr %s28, 6
          %s414 = sadd.s32 %s412, %s413
          %s415 = smul.addr %s414, 128
          %s416 = scalar_lea.hbm %s2, %s415
          %s417 = sshll.u32 %s387, 4
          %s418 = int_to_ptr.vmem [resolvable:$true] %s417
          %423 = dma.vmem_to_hbm [thread:$0]  %s418, 384, %s416, %s384, 128, 128, 8
        $region40: #{iw_max_square_loss.1} parent=23 // pred_fallthru
          _
      $region24: #{iw_max_square_loss.1} parent=5 // pred_fallthru
        _
      %p424 = scmp.le.s32.totalorder 2, %s18
      // Predicated region
      $region41: #{iw_max_square_loss.1} parent=5 // pred_check
        %p425 = pneg %p424
      $region42: #{iw_max_square_loss.1} parent=5 // pred_check_branch
        %427 = sbr.rel (%p425) target = $region44
      $region43: #{iw_max_square_loss.1} parent=5 // pred_region
        %s428 = ssub.s32 %s18, 2
        // Predicated region
        $region45: #{iw_max_square_loss.1} parent=43 // pred_check
          %p429 = pneg %p98
        $region46: #{iw_max_square_loss.1} parent=43 // pred_check_branch
          %431 = sbr.rel (%p429) target = $region48
        $region47: #{iw_max_square_loss.1} parent=43 // pred_region
          %s432 = sand.u32 %s83, 1
          %s433 = scalar_lea.sflag [#allocation4], %s432
          %s434 = sand.u32 %s83, 1
          %s435 = smul.addr %s434, 24
          %s436 = scalar_lea.vmem [#allocation5], %s435
          %437 = dma.done %s433, 384
        $region48: #{iw_max_square_loss.1} parent=43 // pred_fallthru
          _
        // Predicated region
        $region49: #{iw_max_square_loss.1} parent=43 // pred_check
          %p438 = pneg %p126
        $region50: #{iw_max_square_loss.1} parent=43 // pred_check_branch
          %440 = sbr.rel (%p438) target = $region52
        $region51: #{iw_max_square_loss.1} parent=43 // pred_region
          %s441 = sand.u32 %s111, 1
          %s442 = scalar_lea.sflag [#allocation7], %s441
          %s443 = sand.u32 %s111, 1
          %s444 = smul.addr %s443, 24
          %s445 = scalar_lea.vmem [#allocation6], %s444
          %446 = dma.done %s442, 384
        $region52: #{iw_max_square_loss.1} parent=43 // pred_fallthru
          _
      $region44: #{iw_max_square_loss.1} parent=5 // pred_fallthru
        _
    $region6: #{iw_max_square_loss.1} parent=1 // loop_footer
      %s22 = sadd.s32 1, %s18
    $region7: #{iw_max_square_loss.1} parent=1 // loop_footer_branch
      %17 = sbr.rel target = $region3
    $region8: #{iw_max_square_loss.1} parent=1 // loop_exit
      _
    %447 = vsyncpa [#allocation3], 1
    %s448 = scalar_lea.sflag [#allocation3], 1
    %449 = vsyncpa %s448, 1
    %450 = vsyncpa [#allocation4], 1
    %s451 = scalar_lea.sflag [#allocation4], 1
    %452 = vsyncpa %s451, 1
    %453 = vsyncpa [#allocation7], 1
    %s454 = scalar_lea.sflag [#allocation7], 1
    %455 = vsyncpa %s454, 1

</llo_original>
